<compile_context>
chip_gen: v7x
topology: tpu7x:2x2x1
jax: 0.10.0
libtpu: 0.0.40
codegen_flags: <defaults>
</compile_context>

<pallas_src>
import functools

import jax
import jax.numpy as jnp
from jax.experimental import pallas as pl
from jax.experimental.pallas import tpu as pltpu


# ------------------------------ kernels ------------------------------------ #
# One fused multiply-add (+ optional residual + optional ReLU) per element.
# The same body serves both broadcast layouts:
#   * per-lane params:  x (rt, lt) * s (1, lt)  + b (1, lt)
#   * per-row  params:  x (rt, lt) * s (rt, 1)  + b (rt, 1)
# Activations load as-is (f32/bf16), compute in f32, store in the output dtype.

def _fbn_affine_kernel(x_ref, s_ref, b_ref, o_ref, *, relu):
    y = x_ref[...].astype(jnp.float32) * s_ref[...] + b_ref[...]
    if relu:
        y = jnp.maximum(y, 0.0)
    o_ref[...] = y.astype(o_ref.dtype)


def _fbn_affine_residual_kernel(x_ref, r_ref, s_ref, b_ref, o_ref, *, relu):
    y = x_ref[...].astype(jnp.float32) * s_ref[...] + b_ref[...]
    y = y + r_ref[...].astype(jnp.float32)
    if relu:
        y = jnp.maximum(y, 0.0)
    o_ref[...] = y.astype(o_ref.dtype)


# ------------------------------ helpers ------------------------------------ #

def _fold_scale_bias(weight, bias, running_mean, running_var, eps):
    """scale = w * rsqrt(rv + eps); shift = b - rm * scale  (computed in f32)."""
    w = weight.astype(jnp.float32)
    b = bias.astype(jnp.float32)
    rm = running_mean.astype(jnp.float32)
    rv = running_var.astype(jnp.float32)
    scale = w * jax.lax.rsqrt(rv + eps)
    shift = b - rm * scale
    return scale, shift


def _sublane_multiple(dtype):
    # f32 -> 8, bf16/f16 -> 16, int8/fp8 -> 32 (matches packed min tile).
    bits = jnp.dtype(dtype).itemsize * 8
    return max(8, 256 // bits)


def _tpu_vmem_budget_bytes():
    """Per-core VMEM the kernel is allowed to schedule into (with headroom)."""
    cap = 0
    try:
        info = pltpu.get_tpu_info()
        cap = int(getattr(info, "vmem_capacity_bytes", 0) or 0)
    except Exception:
        cap = 0
    if cap <= 0:
        cap = 64 << 20          # conservative default: v7x per-TensorCore VMEM
    return (cap * 3) // 4       # headroom: ~48 MiB on v7x, ~96 MiB on v5e/v6e


def _per_stream_tile_target(n_streams, vmem_budget):
    # Double-buffered pipeline: 2 * n_streams * tile + slack must fit budget.
    t = (vmem_budget - (4 << 20)) // (2 * n_streams)
    return int(min(16 << 20, max(2 << 20, t)))


def _pick_row_block(R, row_bytes, sub, target_tile_bytes, min_steps=1):
    rows = max(1, target_tile_bytes // max(1, row_bytes))
    if min_steps > 1 and R > sub:
        rows = min(rows, pl.cdiv(R, min_steps))
    if rows >= R:
        return R                          # full-dim block is always legal
    if R < sub:
        return R                          # only legal block is the full dim
    if rows < sub:
        return sub                        # may overshoot; lane blocking shrinks it
    return (rows // sub) * sub


def _pick_lane_block(L, row_block, itemsize, target_tile_bytes):
    if L <= 128 or L * row_block * itemsize <= target_tile_bytes:
        return L
    lanes = target_tile_bytes // max(1, row_block * itemsize)
    if lanes >= L:
        return L
    return max(128, (lanes // 128) * 128)


def fold_frozen_bn_into_conv(conv_weight, bn_weight, bn_bias,
                             bn_running_mean, bn_running_var, eps=1e-5,
                             conv_bias=None):
    """Fold a FrozenBatchNorm2d that follows a bias-free Conv2d into the conv.

    conv_weight: (OC, IC, KH, KW) (PyTorch OIHW layout). Returns (w_f, b_f) with
    conv(x, w_f) + b_f == BN(conv(x, conv_weight) + conv_bias). This removes the
    BN's HBM passes over the activation entirely — the highest-value change.
    Note: casting w_f back to conv_weight.dtype quantizes the BN scale into the
    weights for bf16 weights (within normal bf16 tolerance).
    """
    scale, shift = _fold_scale_bias(bn_weight, bn_bias,
                                    bn_running_mean, bn_running_var, eps)
    w_folded = conv_weight.astype(jnp.float32) * scale[:, None, None, None]
    if conv_bias is None:
        b_folded = shift
    else:
        b_folded = conv_bias.astype(jnp.float32) * scale + shift
    return w_folded.astype(conv_weight.dtype), b_folded


# ------------------------- generic pallas launcher -------------------------- #

def _affine_call(x2, scale, shift, *, params_per_lane, relu=False,
                 residual=None, min_row_steps=2):
    """y = x*scale + shift (+residual) (+ReLU) on a 2-D view (R, L).

    params_per_lane=True : scale/shift have shape (L,) — vary along the lane axis.
    params_per_lane=False: scale/shift have shape (R,) — vary along the row axis.
    Padded tail blocks read garbage but their writes are dropped; this is only
    safe because the op is purely elementwise (documented assumption).
    """
    R, L = x2.shape
    dtype = x2.dtype
    itemsize = jnp.dtype(dtype).itemsize
    sub = _sublane_multiple(dtype)
    budget = _tpu_vmem_budget_bytes()
    n_streams = 3 if residual is not None else 2
    target = _per_stream_tile_target(n_streams, budget)

    total_bytes = R * L * itemsize
    min_steps = min_row_steps if total_bytes > (4 << 20) else 1
    rt = _pick_row_block(R, L * itemsize, sub, target, min_steps)
    lt = _pick_lane_block(L, rt, itemsize, target)
    tile_bytes = rt * lt * itemsize
    vmem_limit = int(min(budget,
                         max(16 << 20, 2 * n_streams * tile_bytes + (4 << 20))))

    x_spec = pl.BlockSpec((rt, lt), lambda r, c: (r, c))
    if params_per_lane:
        p_shape = (1, L)
        p_spec = pl.BlockSpec((1, lt), lambda r, c: (0, c))
    else:
        p_shape = (R, 1)
        p_spec = pl.BlockSpec((rt, 1), lambda r, c: (r, 0))
    s2 = scale.astype(jnp.float32).reshape(p_shape)
    b2 = shift.astype(jnp.float32).reshape(p_shape)

    if residual is None:
        kernel = functools.partial(_fbn_affine_kernel, relu=relu)
        operands = (x2, s2, b2)
        in_specs = [x_spec, p_spec, p_spec]
    else:
        kernel = functools.partial(_fbn_affine_residual_kernel, relu=relu)
        operands = (x2, residual, s2, b2)
        in_specs = [x_spec, x_spec, p_spec, p_spec]

    return pl.pallas_call(
        kernel,
        out_shape=jax.ShapeDtypeStruct((R, L), dtype),
        grid=(pl.cdiv(R, rt), pl.cdiv(L, lt)),
        in_specs=in_specs,
        out_specs=x_spec,
        compiler_params=pltpu.CompilerParams(
            dimension_semantics=("parallel", "parallel"),
            vmem_limit_bytes=vmem_limit),
    )(*operands)


# ------------------------------ wrappers ------------------------------------ #

def frozen_batch_norm_2d(x, weight, bias, running_mean, running_var, eps=1e-5,
                         relu=False, residual=None):
    """FrozenBatchNorm2d on NCHW input (PyTorch layout). x: (N, C, H, W).

    Optional fused epilogue: `residual` (same shape as x, added after the
    affine) and `relu` (applied last), matching BN -> (+res) -> ReLU usage in
    the ResNet blocks.
    """
    N, C, H, W = x.shape
    HW = H * W
    scale, shift = _fold_scale_bias(weight, bias, running_mean, running_var, eps)

    if HW % 128 == 0:
        # HW already lane-dense: view as (N*C, HW), per-row scale (free reshape).
        x2 = x.reshape(N * C, HW)
        res2 = residual.reshape(N * C, HW) if residual is not None else None
        s_row = jnp.tile(scale, N)
        b_row = jnp.tile(shift, N)
        out = _affine_call(x2, s_row, b_row, params_per_lane=False,
                           relu=relu, residual=res2)
    else:
        # Deep stages (HW = 49 / 196 / 3136 ...): flatten (C, HW) onto the lane
        # axis so stores stay lane-dense; scale repeated per-HW (tiny array).
        x2 = x.reshape(N, C * HW)
        res2 = residual.reshape(N, C * HW) if residual is not None else None
        s_lane = jnp.repeat(scale, HW)
        b_lane = jnp.repeat(shift, HW)
        out = _affine_call(x2, s_lane, b_lane, params_per_lane=True,
                           relu=relu, residual=res2)
    return out.reshape(N, C, H, W)


def frozen_batch_norm_2d_nhwc(x, weight, bias, running_mean, running_var,
                              eps=1e-5, relu=False, residual=None):
    """FrozenBatchNorm2d on NHWC input (lane-dense on channels). x: (N,H,W,C)."""
    N, H, W, C = x.shape
    R = N * H * W
    scale, shift = _fold_scale_bias(weight, bias, running_mean, running_var, eps)

    x2 = x.reshape(R, C)
    res2 = residual.reshape(R, C) if residual is not None else None

    # Narrow C (e.g. the C=64 ResNet stem): fold rows into lanes so the lane
    # axis is exactly 128-wide (free contiguous reshape) -> unmasked stores.
    if C < 128 and 128 % C == 0 and R % (128 // C) == 0:
        f = 128 // C
        x2 = x2.reshape(R // f, C * f)
        if res2 is not None:
            res2 = res2.reshape(R // f, C * f)
        scale = jnp.tile(scale, f)
        shift = jnp.tile(shift, f)

    out = _affine_call(x2, scale, shift, params_per_lane=True,
                       relu=relu, residual=res2)
    return out.reshape(N, H, W, C)


# -------------------------------- main --------------------------------------- #

if __name__ == "__main__":
    key = jax.random.PRNGKey(0)
    eps = 1e-5
    N, C, H, W = 2, 4, 16, 16
    keys = jax.random.split(key, 10)

    def make_params(kk, c):
        k1, k2, k3, k4 = jax.random.split(kk, 4)
        w = jnp.ones((c,), jnp.float32) + 0.1 * jax.random.normal(k1, (c,))
        b = 0.1 * jax.random.normal(k2, (c,))
        rm = 0.1 * jax.random.normal(k3, (c,))
        rv = jnp.ones((c,), jnp.float32) + 0.1 * jnp.abs(jax.random.normal(k4, (c,)))
        return w, b, rm, rv

    def ref_fbn(x_nchw, w, b, rm, rv):
        s = (w * jax.lax.rsqrt(rv + eps)).reshape(1, -1, 1, 1)
        sh = b.reshape(1, -1, 1, 1) - rm.reshape(1, -1, 1, 1) * s
        return x_nchw * s + sh

    x = jax.random.normal(keys[0], (N, C, H, W), dtype=jnp.float32)
    weight, bias, running_mean, running_var = make_params(keys[1], C)
    ref = ref_fbn(x, weight, bias, running_mean, running_var)

    # 1) NCHW (PyTorch layout), HW % 128 == 0 -> (N*C, HW) per-row-scale path.
    y = jax.block_until_ready(
        frozen_batch_norm_2d(x, weight, bias, running_mean, running_var, eps))
    assert y.shape == (N, C, H, W)
    assert jnp.allclose(y, ref, atol=1e-5, rtol=1e-5), "NCHW mismatch"

    # 1b) fused ReLU epilogue on the same path.
    y_relu = jax.block_until_ready(
        frozen_batch_norm_2d(x, weight, bias, running_mean, running_var, eps,
                             relu=True))
    assert jnp.allclose(y_relu, jnp.maximum(ref, 0.0), atol=1e-5, rtol=1e-5), \
        "NCHW relu mismatch"

    # 2) NCHW deep-stage shape (HW = 7x7 = 49, not a 128 multiple) ->
    #    flattened lane-dense path.
    C7 = 8
    x7 = jax.random.normal(keys[2], (N, C7, 7, 7), jnp.float32)
    w7, b7, rm7, rv7 = make_params(keys[3], C7)
    ref7 = ref_fbn(x7, w7, b7, rm7, rv7)
    y7 = jax.block_until_ready(
        frozen_batch_norm_2d(x7, w7, b7, rm7, rv7, eps))
    assert jnp.allclose(y7, ref7, atol=1e-5, rtol=1e-5), "NCHW HW=49 mismatch"

    # 3) NHWC lane-dense path with fused residual + ReLU (narrow C folded to 128).
    x_nhwc = jnp.transpose(x, (0, 2, 3, 1))
    res_nhwc = jax.random.normal(keys[4], x_nhwc.shape, jnp.float32)
    y_nhwc = jax.block_until_ready(
        frozen_batch_norm_2d_nhwc(x_nhwc, weight, bias, running_mean,
                                  running_var, eps, relu=True,
                                  residual=res_nhwc))
    ref_nhwc = jnp.maximum(jnp.transpose(ref, (0, 2, 3, 1)) + res_nhwc, 0.0)
    assert jnp.allclose(y_nhwc, ref_nhwc, atol=1e-5, rtol=1e-5), \
        "NHWC residual+relu mismatch"

    # 4) bf16 activations: bf16 in/out, f32 compute (16-sublane rounding path).
    y_bf16 = jax.block_until_ready(
        frozen_batch_norm_2d_nhwc(x_nhwc.astype(jnp.bfloat16), weight, bias,
                                  running_mean, running_var, eps))
    assert y_bf16.dtype == jnp.bfloat16
    assert jnp.allclose(jnp.transpose(y_bf16.astype(jnp.float32), (0, 3, 1, 2)),
                        ref, atol=5e-2, rtol=5e-2), "bf16 mismatch"

    # 5) Highest-value integration: fold the frozen BN into the preceding conv.
    ic = 3
    xc = jax.random.normal(keys[5], (N, ic, H, W), jnp.float32)
    wconv = 0.05 * jax.random.normal(keys[6], (C, ic, 3, 3), jnp.float32)

    def conv(inp, w):
        return jax.lax.conv_general_dilated(
            inp, w, window_strides=(1, 1), padding="SAME",
            dimension_numbers=("NCHW", "OIHW", "NCHW"))

    y_conv_bn = frozen_batch_norm_2d(conv(xc, wconv), weight, bias,
                                     running_mean, running_var, eps)
    wf, bf = fold_frozen_bn_into_conv(wconv, weight, bias,
                                      running_mean, running_var, eps)
    y_folded = jax.block_until_ready(conv(xc, wf) + bf.reshape(1, C, 1, 1))
    assert jnp.allclose(y_conv_bn, y_folded, atol=1e-4, rtol=1e-4), \
        "conv+BN fold mismatch"

    print("KERNEL_OK")
</pallas_src>

<mosaic_0001>
module attributes {stable_mosaic.version = 11 : i64} {
  func.func @_fbn_affine_kernel(%arg0: i32, %arg1: i32, %arg2: memref<8x256xf32, #tpu.memory_space<vmem>>, %arg3: memref<8x1xf32, #tpu.memory_space<vmem>>, %arg4: memref<8x1xf32, #tpu.memory_space<vmem>>, %arg5: memref<8x256xf32, #tpu.memory_space<vmem>>) attributes {dimension_semantics = [#tpu.dimension_semantics<parallel>, #tpu.dimension_semantics<parallel>], iteration_bounds = array<i64: 1, 1>, scalar_prefetch = 0 : i64, scratch_operands = 0 : i64, tpu.core_type = #tpu.core_type<tc>, window_params = [{transform_indices = @transform_0, window_bounds = array<i64: 8, 256>}, {transform_indices = @transform_1, window_bounds = array<i64: 8, 1>}, {transform_indices = @transform_2, window_bounds = array<i64: 8, 1>}, {transform_indices = @transform_3, window_bounds = array<i64: 8, 256>}]} {
    %c0 = arith.constant 0 : index
    %c0_0 = arith.constant 0 : index
    %0 = vector.load %arg2[%c0, %c0_0] : memref<8x256xf32, #tpu.memory_space<vmem>>, vector<8x256xf32>
    %c0_1 = arith.constant 0 : index
    %c0_2 = arith.constant 0 : index
    %1 = vector.load %arg3[%c0_1, %c0_2] : memref<8x1xf32, #tpu.memory_space<vmem>>, vector<8x1xf32>
    %2 = vector.broadcast %1 : vector<8x1xf32> to vector<8x256xf32>
    %3 = arith.mulf %0, %2 : vector<8x256xf32>
    %c0_3 = arith.constant 0 : index
    %c0_4 = arith.constant 0 : index
    %4 = vector.load %arg4[%c0_3, %c0_4] : memref<8x1xf32, #tpu.memory_space<vmem>>, vector<8x1xf32>
    %5 = vector.broadcast %4 : vector<8x1xf32> to vector<8x256xf32>
    %6 = arith.addf %3, %5 : vector<8x256xf32>
    %c0_5 = arith.constant 0 : index
    %c0_6 = arith.constant 0 : index
    %7 = vector.load %arg5[%c0_5, %c0_6] : memref<8x256xf32, #tpu.memory_space<vmem>>, vector<8x256xf32>
    tpu.vector_store %arg5[%c0_5, %c0_6], %6 {strides = array<i32>} : memref<8x256xf32, #tpu.memory_space<vmem>>, vector<8x256xf32>,
    return
  }
  func.func @transform_0(%arg0: i32, %arg1: i32) -> (i32, i32) {
    %c0_i32 = arith.constant 0 : i32
    return %arg0, %arg1 : i32, i32
  }
  func.func @transform_1(%arg0: i32, %arg1: i32) -> (i32, i32) {
    %c0_i32 = arith.constant 0 : i32
    %c0_i32_0 = arith.constant 0 : i32
    return %arg0, %c0_i32 : i32, i32
  }
  func.func @transform_2(%arg0: i32, %arg1: i32) -> (i32, i32) {
    %c0_i32 = arith.constant 0 : i32
    %c0_i32_0 = arith.constant 0 : i32
    return %arg0, %c0_i32 : i32, i32
  }
  func.func @transform_3(%arg0: i32, %arg1: i32) -> (i32, i32) {
    %c0_i32 = arith.constant 0 : i32
    return %arg0, %arg1 : i32, i32
  }
}

</mosaic_0001>

<llo_original>
// kernel: tpu_custom_call.1
$region0: #{tpu_custom_call.1}
  #allocation0 [shape = 'u32[]', space=smem, size = 0x4, offset = 0x4, fixed_abs, tag = 'smem constant byte address 0x4 - core index']
  #allocation1 [shape = 'u32[144,128]{1,0:T(1,128)}', space=vmem, size = 0x12000, scoped, tag = 'internal scratch']
  %s0 = inlined_call_operand.vmem [shape: f32[8,256], index: 0, kind: input, shape index: {}]
  %s1 = inlined_call_operand.vmem [shape: f32[8,1], index: 1, kind: input, shape index: {}]
  %s2 = inlined_call_operand.vmem [shape: f32[8,1], index: 2, kind: input, shape index: {}]
  %s3 = inlined_call_operand.hbm [shape: f32[8,256], index: 3, kind: output, shape index: {}]
  %s4 = sld [smem:[#allocation0]]
  $region22: #{tpu_custom_call.1} parent=0
    _
  %s6 = ssub.s32 1, %s4
  %s7 = scalar_select 0, %s6, %s4
  $region1: #{tpu_custom_call.1} parent=0
    #allocation2 [shape = 'u8[8192]{0}', space=vmem, size = 0x2000, scoped, tag = 'output window, operand 0, single buffered']
    #allocation3 [shape = 's32[1]{0}', space=sflag, size = 0x4, scoped, tag = 'scoped memory for tpu_custom_call.1']
    %8 = vsyncpa [#allocation3], 0
    // Predicated region
    $region2: #{tpu_custom_call.1} parent=1 // pred_check
      _
    $region3: #{tpu_custom_call.1} parent=1 // pred_check_branch
      %10 = sbr.rel (0) target = $region5
    $region4: #{tpu_custom_call.1} parent=1 // pred_region
      _
    $region5: #{tpu_custom_call.1} parent=1 // pred_fallthru
      _
    // Predicated region
    $region6: #{tpu_custom_call.1} parent=1 // pred_check
      _
    $region7: #{tpu_custom_call.1} parent=1 // pred_check_branch
      %12 = sbr.rel (0) target = $region9
    $region8: #{tpu_custom_call.1} parent=1 // pred_region
      _
    $region9: #{tpu_custom_call.1} parent=1 // pred_fallthru
      _
    // Predicated region
    $region10: #{tpu_custom_call.1} parent=1 // pred_check
      _
    $region11: #{tpu_custom_call.1} parent=1 // pred_check_branch
      %14 = sbr.rel (0) target = $region13
    $region12: #{tpu_custom_call.1} parent=1 // pred_region
      _
    $region13: #{tpu_custom_call.1} parent=1 // pred_fallthru
      _
    %v15 = vld [vmem:[%s0] sm:$0xff]
    %v16 = vld [vmem:[%s0 + $0x8] sm:$0xff]
    %v17 = vld [vmem:[%s1] sm:$0xff]
    %19 = vset.pattern.permute.xlu0 0
    %20 = vperm.xlu0 %19, %v17
    %v21 = vpop.permute.xlu0 %20
    %v23 = vmul.f32 %v15, %v21
    %v24 = vmul.f32 %v16, %v21
    %v25 = vld [vmem:[%s2] sm:$0xff]
    %27 = vset.pattern.permute.xlu0 0
    %28 = vperm.xlu0 %27, %v25
    %v29 = vpop.permute.xlu0 %28
    %v31 = vadd.f32 %v23, %v29
    %v32 = vadd.f32 %v24, %v29
    %33 = vst [vmem:[#allocation2] sm:$0xff] %v31
    %34 = vst [vmem:[#allocation2 + $0x8] sm:$0xff] %v32
    // Predicated region
    $region14: #{tpu_custom_call.1} parent=1 // pred_check
      _
    $region15: #{tpu_custom_call.1} parent=1 // pred_check_branch
      %36 = sbr.rel (0) target = $region17
    $region16: #{tpu_custom_call.1} parent=1 // pred_region
      %s38 = ssub.s32 256, 256
      %39 = vsyncadd [#allocation3], %s38
      %s41 = sshll.u32 [#allocation2], 4
      %s42 = int_to_ptr.vmem [resolvable:$true] %s41
      %44 = dma.vmem_to_hbm [thread:$0]  %s42, 256, %s3, [#allocation3]
    $region17: #{tpu_custom_call.1} parent=1 // pred_fallthru
      _
    // Predicated region
    $region18: #{tpu_custom_call.1} parent=1 // pred_check
      _
    $region19: #{tpu_custom_call.1} parent=1 // pred_check_branch
      %46 = sbr.rel (0) target = $region21
    $region20: #{tpu_custom_call.1} parent=1 // pred_region
      %47 = dma.done [#allocation3], 256
    $region21: #{tpu_custom_call.1} parent=1 // pred_fallthru
      _
    %48 = vsyncpa [#allocation3], 1

</llo_original>
